<compile_context>
chip_gen: v5e
topology: v5e:2x2
jax: 0.10.0
libtpu: 0.0.40
codegen_flags: <defaults>
</compile_context>

<pallas_src>
import jax
import jax.numpy as jnp
from jax.experimental import pallas as pl
from jax.experimental.pallas import tpu as pltpu


_VMEM_LIMIT = 32 * 1024 * 1024  # safe on v5e/v6e (128 MiB) AND v7x (64 MiB phys / 32 MiB scoped)


def _pick_tile(dim, pref):
    """Prefer a 128-multiple tile; fall back to the full dim for small/odd sizes."""
    return pref if dim % pref == 0 else dim


# ----------------------------------------------------------------------------
# Kernel 1: fused two-layer MLP   y = (x @ W1 + b1) @ W2 + b2
#   - one pallas_call, intermediate activation lives only in VMEM/vregs
#   - grid over M tiles, marked "parallel" (megacore sharding on v7x)
#   - weights bf16 (half the HBM bytes), accumulation + bias in f32
# ----------------------------------------------------------------------------
def _fused_mlp_kernel(x_ref, w1_ref, b1_ref, w2_ref, b2_ref, o_ref):
    x = x_ref[...].astype(jnp.bfloat16)
    h = jnp.dot(x, w1_ref[...], preferred_element_type=jnp.float32) + b1_ref[...]
    h = h.astype(jnp.bfloat16)
    y = jnp.dot(h, w2_ref[...], preferred_element_type=jnp.float32) + b2_ref[...]
    o_ref[...] = y.astype(o_ref.dtype)


def pallas_fused_mlp(x, w1, b1, w2, b2, *, tm=128):
    M, K = x.shape
    K2, H = w1.shape
    H2, N = w2.shape
    assert K == K2 and H == H2
    assert b1.shape == (1, H) and b2.shape == (1, N)
    tm = _pick_tile(M, tm)

    # Weights stay VMEM-resident across the M grid; guard the residency budget
    # (larger registered models should go through the tiled pallas_linear path).
    resident = 2 * ((K * H + H * N) * 2 + (tm * K + tm * N) * 4 + (H + N) * 4)
    assert resident < 24 * 1024 * 1024, "fused path too large for VMEM; use pallas_linear"

    flops = 2 * M * K * H + 2 * M * H * N
    bytes_accessed = (M * K + M * N) * 4 + (K * H + H * N) * 2 + (H + N) * 4

    return pl.pallas_call(
        _fused_mlp_kernel,
        out_shape=jax.ShapeDtypeStruct((M, N), x.dtype),
        grid=(M // tm,),
        in_specs=[
            pl.BlockSpec((tm, K), lambda i: (i, 0)),
            pl.BlockSpec((K, H), lambda i: (0, 0)),
            pl.BlockSpec((1, H), lambda i: (0, 0)),
            pl.BlockSpec((H, N), lambda i: (0, 0)),
            pl.BlockSpec((1, N), lambda i: (0, 0)),
        ],
        out_specs=pl.BlockSpec((tm, N), lambda i: (i, 0)),
        compiler_params=pltpu.CompilerParams(
            dimension_semantics=("parallel",),
            vmem_limit_bytes=_VMEM_LIMIT,
        ),
        cost_estimate=pl.CostEstimate(
            flops=flops, transcendentals=0, bytes_accessed=bytes_accessed),
    )(x, w1, b1, w2, b2)


# ----------------------------------------------------------------------------
# Kernel 2: general tiled linear   y = x @ W + b
#   - M/N/K grid, VMEM f32 accumulator, pl.when init/finalize
#   - ("parallel","parallel","arbitrary") so both TCs are used on v7x
# ----------------------------------------------------------------------------
def _linear_tiled_kernel(x_ref, w_ref, b_ref, o_ref, acc_ref):
    k = pl.program_id(2)

    @pl.when(k == 0)
    def _():
        acc_ref[...] = jnp.zeros_like(acc_ref)

    acc_ref[...] += jnp.dot(x_ref[...].astype(jnp.bfloat16), w_ref[...],
                            preferred_element_type=jnp.float32)

    @pl.when(k == pl.num_programs(2) - 1)
    def _():
        o_ref[...] = (acc_ref[...] + b_ref[...]).astype(o_ref.dtype)


def pallas_linear(x, w, b, *, tm=128, tn=256, tk=256):
    """y = x @ w + b with M/N/K tiling; w is bf16, b is (1, OUT) f32."""
    M, K = x.shape
    K2, N = w.shape
    assert K == K2 and b.shape == (1, N)
    tm, tn, tk = _pick_tile(M, tm), _pick_tile(N, tn), _pick_tile(K, tk)

    return pl.pallas_call(
        _linear_tiled_kernel,
        out_shape=jax.ShapeDtypeStruct((M, N), x.dtype),
        grid=(M // tm, N // tn, K // tk),
        in_specs=[
            pl.BlockSpec((tm, tk), lambda i, j, k: (i, k)),
            pl.BlockSpec((tk, tn), lambda i, j, k: (k, j)),
            pl.BlockSpec((1, tn), lambda i, j, k: (0, j)),
        ],
        out_specs=pl.BlockSpec((tm, tn), lambda i, j, k: (i, j)),
        scratch_shapes=[pltpu.VMEM((tm, tn), jnp.float32)],
        compiler_params=pltpu.CompilerParams(
            dimension_semantics=("parallel", "parallel", "arbitrary"),
            vmem_limit_bytes=_VMEM_LIMIT,
        ),
    )(x, w, b)


# ----------------------------------------------------------------------------
# Kernel 3: stacked multi-model linear   y[m] = x @ W[m] + b[m]
#   - one pallas_call with a model grid axis amortizes launch overhead across
#     all registered sub-models matching a name
# ----------------------------------------------------------------------------
def _stacked_linear_kernel(x_ref, w_ref, b_ref, o_ref):
    y = jnp.dot(x_ref[...].astype(jnp.bfloat16), w_ref[0],
                preferred_element_type=jnp.float32) + b_ref[0]
    o_ref[0] = y.astype(o_ref.dtype)


def pallas_linear_stacked(x, w_stack, b_stack, *, tm=128):
    M, K = x.shape
    nm, K2, N = w_stack.shape
    assert K == K2 and b_stack.shape == (nm, 1, N)
    tm = _pick_tile(M, tm)

    return pl.pallas_call(
        _stacked_linear_kernel,
        out_shape=jax.ShapeDtypeStruct((nm, M, N), x.dtype),
        grid=(nm, M // tm),
        in_specs=[
            pl.BlockSpec((tm, K), lambda m, i: (i, 0)),
            pl.BlockSpec((1, K, N), lambda m, i: (m, 0, 0)),
            pl.BlockSpec((1, 1, N), lambda m, i: (m, 0, 0)),
        ],
        out_specs=pl.BlockSpec((1, tm, N), lambda m, i: (m, i, 0)),
        compiler_params=pltpu.CompilerParams(
            dimension_semantics=("parallel", "parallel"),
            vmem_limit_bytes=_VMEM_LIMIT,
        ),
    )(x, w_stack, b_stack)


# ----------------------------------------------------------------------------
# Registered sub-model: a Linear whose forward is the tiled Pallas kernel.
# Weights stored in bf16 (halves HBM traffic); bias kept f32 (no bf16 VPU on v5e).
# ----------------------------------------------------------------------------
class PallasLinear:
    def __init__(self, key, in_features, out_features):
        kw, kb = jax.random.split(key)
        scale = 1.0 / float(in_features) ** 0.5
        w = jax.random.uniform(kw, (in_features, out_features), jnp.float32,
                               minval=-scale, maxval=scale)
        b = jax.random.uniform(kb, (1, out_features), jnp.float32,
                               minval=-scale, maxval=scale)
        self.weight = w.astype(jnp.bfloat16)   # bf16 MXU operand
        self.bias = b                          # f32 bias, pre-reshaped to (1, OUT)

    def __call__(self, x):
        return pallas_linear(x, self.weight, self.bias)


# ----------------------------------------------------------------------------
# ModelRegistrar: faithful port of the PyTorch container semantics.
# ----------------------------------------------------------------------------
class ModelRegistrar:
    def __init__(self, model_dir, device):
        self.model_dict = {}           # name -> model (ordered, like nn.ModuleDict)
        self.model_dir = model_dir
        self.device = device

    def forward(self):
        raise NotImplementedError(
            'Although ModelRegistrar is a nn.Module, it is only to store parameters.')

    def __call__(self):
        return self.forward()

    def get_model(self, name, model_if_absent=None):
        if name in self.model_dict:
            return self.model_dict[name]
        elif model_if_absent is not None:
            # .to(self.device) analog: ensure params live on the target device.
            if hasattr(model_if_absent, 'weight'):
                model_if_absent.weight = jax.device_put(model_if_absent.weight, self.device)
                model_if_absent.bias = jax.device_put(model_if_absent.bias, self.device)
            self.model_dict[name] = model_if_absent
            return self.model_dict[name]
        else:
            raise ValueError(f'{name} was never initialized in this Registrar!')

    def get_name_match(self, name):
        ret_model_list = []
        for key in self.model_dict.keys():
            if name in key:
                ret_model_list.append(self.model_dict[key])
        return ret_model_list

    def get_all_but_name_match(self, names):
        if not isinstance(names, list) and (not isinstance(names, tuple)):
            names = [names]
        ret_model_list = []
        for key in self.model_dict.keys():
            if all([name not in key for name in names]):
                ret_model_list.append(self.model_dict[key])
        return ret_model_list

    def print_model_names(self):
        print(list(self.model_dict.keys()))

    # --- Pallas execution helpers (perf: batch / fuse registered sub-models) ---
    def run_name_match(self, name, x):
        """Run ALL sub-models matching `name` on x in ONE pallas_call (model grid axis)."""
        models = self.get_name_match(name)
        if not models:
            raise ValueError(f'no registered model matches {name}')
        w_stack = jnp.stack([m.weight for m in models], axis=0)   # (nm, K, N) bf16
        b_stack = jnp.stack([m.bias for m in models], axis=0)     # (nm, 1, N) f32
        return pallas_linear_stacked(x, w_stack, b_stack)

    def run_chain2(self, first_name, second_name, x):
        """Run two chained registered linears fused in ONE pallas_call."""
        m1 = self.get_model(first_name)
        m2 = self.get_model(second_name)
        return pallas_fused_mlp(x, m1.weight, m1.bias, m2.weight, m2.bias)

    # TODO(synk): save_models / load_models / load_model_from_file are checkpoint-file
    # I/O (torch.save/load); no Pallas/compute equivalent -- intentionally omitted.


# ----------------------------------------------------------------------------
# Demo
# ----------------------------------------------------------------------------
if __name__ == "__main__":
    key = jax.random.PRNGKey(0)
    k_enc, k_dec, k_h0, k_h1, k_h2, k_x = jax.random.split(key, 6)

    device = jax.devices()[0]
    registrar = ModelRegistrar(model_dir="/tmp/unused", device=device)

    # forward() must raise exactly like the PyTorch module.
    try:
        registrar()
        raise AssertionError("ModelRegistrar.forward() should have raised")
    except NotImplementedError:
        pass

    # Unregistered lookup without a default must raise ValueError.
    try:
        registrar.get_model("missing/model")
        raise AssertionError("get_model on a missing name should have raised")
    except ValueError:
        pass

    # Small but tile-friendly shapes: 128-multiples give >1 parallel grid step
    # (megacore) and lane-dense outputs, while staying tiny in absolute terms.
    B, D = 256, 256
    enc = registrar.get_model("encoder/linear", PallasLinear(k_enc, D, D))
    dec = registrar.get_model("decoder/linear", PallasLinear(k_dec, D, D))
    registrar.get_model("head/a", PallasLinear(k_h0, D, D))
    registrar.get_model("head/b", PallasLinear(k_h1, D, D))
    registrar.get_model("head/c", PallasLinear(k_h2, D, D))

    # Container semantics checks.
    assert registrar.get_model("encoder/linear") is enc
    assert len(registrar.get_name_match("encoder")) == 1
    assert len(registrar.get_name_match("head")) == 3
    assert len(registrar.get_all_but_name_match(["encoder", "head"])) == 1
    assert len(registrar.get_all_but_name_match("linear")) == 3

    x = jax.random.normal(k_x, (B, D), dtype=jnp.float32)

    # Reference helper mirroring the kernel numerics (bf16 operands, f32 accum/bias).
    def ref_linear(xx, w_bf16, b_f32):
        return jnp.dot(xx.astype(jnp.bfloat16), w_bf16,
                       preferred_element_type=jnp.float32) + b_f32

    # 1) Fused encoder->decoder: ONE pallas_call, intermediate never leaves VMEM.
    y_fused = jax.block_until_ready(registrar.run_chain2("encoder/linear", "decoder/linear", x))
    y_ref = ref_linear(ref_linear(x, enc.weight, enc.bias), dec.weight, dec.bias)
    assert jnp.allclose(y_fused, y_ref, atol=1e-3, rtol=1e-3)

    # 2) Standalone tiled linear (M/N/K grid + f32 VMEM accumulator).
    h = jax.block_until_ready(enc(x))
    h_ref = ref_linear(x, enc.weight, enc.bias)
    assert jnp.allclose(h, h_ref, atol=1e-3, rtol=1e-3)

    # 3) All "head/*" sub-models in ONE pallas_call (model grid axis).
    heads = registrar.get_name_match("head")
    y_heads = jax.block_until_ready(registrar.run_name_match("head", x))
    y_heads_ref = jnp.stack([ref_linear(x, m.weight, m.bias) for m in heads], axis=0)
    assert y_heads.shape == (3, B, D)
    assert jnp.allclose(y_heads, y_heads_ref, atol=1e-3, rtol=1e-3)

    print("KERNEL_OK")
</pallas_src>

<mosaic_0001>
module attributes {stable_mosaic.version = 11 : i64} {
  func.func @_fused_mlp_kernel(%arg0: i32, %arg1: memref<128x256xf32, #tpu.memory_space<vmem>>, %arg2: memref<256x256xbf16, #tpu.memory_space<vmem>>, %arg3: memref<1x256xf32, #tpu.memory_space<vmem>>, %arg4: memref<256x256xbf16, #tpu.memory_space<vmem>>, %arg5: memref<1x256xf32, #tpu.memory_space<vmem>>, %arg6: memref<128x256xf32, #tpu.memory_space<vmem>>) attributes {dimension_semantics = [#tpu.dimension_semantics<parallel>], iteration_bounds = array<i64: 2>, scalar_prefetch = 0 : i64, scratch_operands = 0 : i64, tpu.core_type = #tpu.core_type<tc>, window_params = [{transform_indices = @transform_0, window_bounds = array<i64: 128, 256>}, {pipeline_mode = #tpu.pipeline_mode<synchronous>, transform_indices = @transform_1, window_bounds = array<i64: 256, 256>}, {pipeline_mode = #tpu.pipeline_mode<synchronous>, transform_indices = @transform_2, window_bounds = array<i64: 1, 256>}, {pipeline_mode = #tpu.pipeline_mode<synchronous>, transform_indices = @transform_3, window_bounds = array<i64: 256, 256>}, {pipeline_mode = #tpu.pipeline_mode<synchronous>, transform_indices = @transform_4, window_bounds = array<i64: 1, 256>}, {transform_indices = @transform_5, window_bounds = array<i64: 128, 256>}]} {
    %c0 = arith.constant 0 : index
    %c0_0 = arith.constant 0 : index
    %0 = vector.load %arg1[%c0, %c0_0] : memref<128x256xf32, #tpu.memory_space<vmem>>, vector<128x256xf32>
    %1 = arith.truncf %0 : vector<128x256xf32> to vector<128x256xbf16>
    %c0_1 = arith.constant 0 : index
    %c0_2 = arith.constant 0 : index
    %2 = vector.load %arg2[%c0_1, %c0_2] : memref<256x256xbf16, #tpu.memory_space<vmem>>, vector<256x256xbf16>
    %cst = arith.constant dense<0.000000e+00> : vector<128x256xf32>
    %3 = tpu.matmul %1, %2, %cst {dimension_numbers = #tpu.dot_dimension_numbers<[1], [0], [0], [1], [0, 0, 1, 1], [], []>} : vector<128x256xbf16>, vector<256x256xbf16>, vector<128x256xf32> -> vector<128x256xf32>
    %c0_3 = arith.constant 0 : index
    %c0_4 = arith.constant 0 : index
    %4 = vector.load %arg3[%c0_3, %c0_4] : memref<1x256xf32, #tpu.memory_space<vmem>>, vector<1x256xf32>
    %5 = vector.broadcast %4 : vector<1x256xf32> to vector<128x256xf32>
    %6 = arith.addf %3, %5 : vector<128x256xf32>
    %7 = arith.truncf %6 : vector<128x256xf32> to vector<128x256xbf16>
    %c0_5 = arith.constant 0 : index
    %c0_6 = arith.constant 0 : index
    %8 = vector.load %arg4[%c0_5, %c0_6] : memref<256x256xbf16, #tpu.memory_space<vmem>>, vector<256x256xbf16>
    %cst_7 = arith.constant dense<0.000000e+00> : vector<128x256xf32>
    %9 = tpu.matmul %7, %8, %cst_7 {dimension_numbers = #tpu.dot_dimension_numbers<[1], [0], [0], [1], [0, 0, 1, 1], [], []>} : vector<128x256xbf16>, vector<256x256xbf16>, vector<128x256xf32> -> vector<128x256xf32>
    %c0_8 = arith.constant 0 : index
    %c0_9 = arith.constant 0 : index
    %10 = vector.load %arg5[%c0_8, %c0_9] : memref<1x256xf32, #tpu.memory_space<vmem>>, vector<1x256xf32>
    %11 = vector.broadcast %10 : vector<1x256xf32> to vector<128x256xf32>
    %12 = arith.addf %9, %11 : vector<128x256xf32>
    %c0_10 = arith.constant 0 : index
    %c0_11 = arith.constant 0 : index
    %13 = vector.load %arg6[%c0_10, %c0_11] : memref<128x256xf32, #tpu.memory_space<vmem>>, vector<128x256xf32>
    tpu.vector_store %arg6[%c0_10, %c0_11], %12 {strides = array<i32>} : memref<128x256xf32, #tpu.memory_space<vmem>>, vector<128x256xf32>,
    return
  }
  func.func @transform_0(%arg0: i32) -> (i32, i32) {
    %c0_i32 = arith.constant 0 : i32
    %c0_i32_0 = arith.constant 0 : i32
    return %arg0, %c0_i32 : i32, i32
  }
  func.func @transform_1(%arg0: i32) -> (i32, i32) {
    %c0_i32 = arith.constant 0 : i32
    %c0_i32_0 = arith.constant 0 : i32
    %c0_i32_1 = arith.constant 0 : i32
    return %c0_i32, %c0_i32_0 : i32, i32
  }
  func.func @transform_2(%arg0: i32) -> (i32, i32) {
    %c0_i32 = arith.constant 0 : i32
    %c0_i32_0 = arith.constant 0 : i32
    %c0_i32_1 = arith.constant 0 : i32
    return %c0_i32, %c0_i32_0 : i32, i32
  }
  func.func @transform_3(%arg0: i32) -> (i32, i32) {
    %c0_i32 = arith.constant 0 : i32
    %c0_i32_0 = arith.constant 0 : i32
    %c0_i32_1 = arith.constant 0 : i32
    return %c0_i32, %c0_i32_0 : i32, i32
  }
  func.func @transform_4(%arg0: i32) -> (i32, i32) {
    %c0_i32 = arith.constant 0 : i32
    %c0_i32_0 = arith.constant 0 : i32
    %c0_i32_1 = arith.constant 0 : i32
    return %c0_i32, %c0_i32_0 : i32, i32
  }
  func.func @transform_5(%arg0: i32) -> (i32, i32) {
    %c0_i32 = arith.constant 0 : i32
    %c0_i32_0 = arith.constant 0 : i32
    return %arg0, %c0_i32 : i32, i32
  }
}

</mosaic_0001>

<llo_original>
// kernel: tpu_custom_call.1
$region0: #{tpu_custom_call.1}
  #allocation0 [shape = 'u32[]', space=smem, size = 0x4, offset = 0x4, fixed_abs, tag = 'smem constant byte address 0x4 - core index']
  #allocation1 [shape = 'u32[72,128]{1,0:T(1,128)}', space=vmem, size = 0x9000, scoped, tag = 'internal scratch']
  %s0 = inlined_call_operand.hbm [shape: f32[256,256], index: 0, kind: input, shape index: {}]
  %s1 = inlined_call_operand.hbm [shape: bf16[256,256], index: 1, kind: input, shape index: {}]
  %s2 = inlined_call_operand.hbm [shape: f32[1,256], index: 2, kind: input, shape index: {}]
  %s3 = inlined_call_operand.hbm [shape: bf16[256,256], index: 3, kind: input, shape index: {}]
  %s4 = inlined_call_operand.vmem [shape: f32[1,256], index: 4, kind: input, shape index: {}]
  %s5 = inlined_call_operand.hbm [shape: f32[256,256], index: 5, kind: output, shape index: {}]
  %s6 = sld [smem:[#allocation0]]
  $region69: #{tpu_custom_call.1} parent=0
    _
  %s8 = ssub.s32 1, %s6
  %s9 = scalar_select 0, %s8, %s6
  $region1: #{tpu_custom_call.1} parent=0
    #allocation2 [shape = 'u8[262144]{0}', space=vmem, size = 0x40000, scoped, tag = 'input window, operand 0']
    #allocation3 [shape = 's32[2]{0}', space=sflag, size = 0x8, scoped, tag = 'scoped memory for tpu_custom_call.1']
    #allocation4 [shape = 's32[2]{0}', space=sflag, size = 0x8, scoped, tag = 'scoped memory for tpu_custom_call.1']
    #allocation5 [shape = 'u8[131072]{0}', space=vmem, size = 0x20000, scoped, tag = 'input window, operand 1, single buffered']
    #allocation6 [shape = 's32[1]{0}', space=sflag, size = 0x4, scoped, tag = 'scoped memory for tpu_custom_call.1']
    #allocation7 [shape = 'u8[1024]{0}', space=vmem, size = 0x400, scoped, tag = 'input window, operand 2, single buffered']
    #allocation8 [shape = 'u8[131072]{0}', space=vmem, size = 0x20000, scoped, tag = 'input window, operand 3, single buffered']
    #allocation9 [shape = 's32[1]{0}', space=sflag, size = 0x4, scoped, tag = 'scoped memory for tpu_custom_call.1']
    #allocation10 [shape = 'u8[262144]{0}', space=vmem, size = 0x40000, scoped, tag = 'output window, operand 0']
    %10 = vsyncpa [#allocation3], 0
    %s11 = scalar_lea.sflag [#allocation3], 1
    %12 = vsyncpa %s11, 0
    %13 = vsyncpa [#allocation6], 0
    %14 = vsyncpa [#allocation9], 0
    %15 = vsyncpa [#allocation4], 0
    %s16 = scalar_lea.sflag [#allocation4], 1
    %17 = vsyncpa %s16, 0
    loop: start=0, step=1, limit=4
    $region2: #{tpu_custom_call.1} parent=1 // loop_pre_header
      _
    $region3: #{tpu_custom_call.1} parent=1 // loop_header
      %s19 = sphi 0, %s23
      %p20 = scmp.ge.s32.totalorder %s19, 4
      %s29 = sphi 0, %s31
      %s32 = sphi 0, %s29
      %s33 = sphi 0, %s32
      %s49 = sphi 0, %s33
      %s53 = sphi 0, %s53
      %s55 = sphi 0, %s53
      %s56 = sphi 0, %s55
      %s70 = sphi 0, %s56
      %s74 = sphi 0, %s74
      %s76 = sphi 0, %s74
      %s77 = sphi 0, %s76
      %s91 = sphi 0, %s77
      %s95 = sphi 0, %s95
      %s97 = sphi 0, %s95
      %s98 = sphi 0, %s97
      %s112 = sphi 0, %s98
      %s116 = sphi 0, %s116
      %s118 = sphi 0, %s116
      %s119 = sphi 0, %s118
      %s133 = sphi 0, %s119
      %s139 = sphi 0, %s141
      %s142 = sphi 0, %s139
      %s143 = sphi 0, %s142
      %s159 = sphi 0, %s143
    $region4: #{tpu_custom_call.1} parent=1 // loop_header_branch
      %22 = sbr.rel (%p20) target = $region8
    $region5: #{tpu_custom_call.1} parent=1 // loop_body
      %s24 = ssub.s32 %s19, 1
      %s25 = ssub.s32 %s19, 2
      %s26 = sadd.s32 %s19, 1
      %s27 = ssub.s32 %s19, %s26
      %p28 = scmp.eq.s32.totalorder %s27, 0
      %s30 = sadd.s32 %s29, 1
      %s31 = scalar_select %p28, %s29, %s30
      %p34 = pneg %p28
      %p35 = scmp.eq.s32.totalorder %s19, 1
      %p36 = por %p34, %p35
      %p37 = scmp.ne.s32.totalorder %s29, %s32
      %p38 = scmp.eq.s32.totalorder %s19, 0
      %p39 = por %p37, %p38
      %p40 = scmp.ne.s32.totalorder %s29, %s32
      %p41 = scmp.eq.s32.totalorder %s24, 1
      %p42 = por %p40, %p41
      %p43 = scmp.ne.s32.totalorder %s32, %s33
      %p44 = scmp.eq.s32.totalorder %s24, 0
      %p45 = por %p43, %p44
      %p46 = scmp.ne.s32.totalorder %s32, %s33
      %p47 = scmp.eq.s32.totalorder %s25, 1
      %p48 = por %p46, %p47
      %p50 = scmp.ne.s32.totalorder %s33, %s49
      %p51 = scmp.eq.s32.totalorder %s25, 0
      %p52 = por %p50, %p51
      %s54 = sadd.s32 %s53, 1
      %p57 = scmp.eq.s32.totalorder %s19, 1
      %p58 = scmp.ne.s32.totalorder %s53, %s55
      %p59 = scmp.eq.s32.totalorder %s19, 0
      %p60 = por %p58, %p59
      %p61 = scmp.ne.s32.totalorder %s53, %s55
      %p62 = scmp.eq.s32.totalorder %s24, 1
      %p63 = por %p61, %p62
      %p64 = scmp.ne.s32.totalorder %s55, %s56
      %p65 = scmp.eq.s32.totalorder %s24, 0
      %p66 = por %p64, %p65
      %p67 = scmp.ne.s32.totalorder %s55, %s56
      %p68 = scmp.eq.s32.totalorder %s25, 1
      %p69 = por %p67, %p68
      %p71 = scmp.ne.s32.totalorder %s56, %s70
      %p72 = scmp.eq.s32.totalorder %s25, 0
      %p73 = por %p71, %p72
      %s75 = sadd.s32 %s74, 1
      %p78 = scmp.eq.s32.totalorder %s19, 1
      %p79 = scmp.ne.s32.totalorder %s74, %s76
      %p80 = scmp.eq.s32.totalorder %s19, 0
      %p81 = por %p79, %p80
      %p82 = scmp.ne.s32.totalorder %s74, %s76
      %p83 = scmp.eq.s32.totalorder %s24, 1
      %p84 = por %p82, %p83
      %p85 = scmp.ne.s32.totalorder %s76, %s77
      %p86 = scmp.eq.s32.totalorder %s24, 0
      %p87 = por %p85, %p86
      %p88 = scmp.ne.s32.totalorder %s76, %s77
      %p89 = scmp.eq.s32.totalorder %s25, 1
      %p90 = por %p88, %p89
      %p92 = scmp.ne.s32.totalorder %s77, %s91
      %p93 = scmp.eq.s32.totalorder %s25, 0
      %p94 = por %p92, %p93
      %s96 = sadd.s32 %s95, 1
      %p99 = scmp.eq.s32.totalorder %s19, 1
      %p100 = scmp.ne.s32.totalorder %s95, %s97
      %p101 = scmp.eq.s32.totalorder %s19, 0
      %p102 = por %p100, %p101
      %p103 = scmp.ne.s32.totalorder %s95, %s97
      %p104 = scmp.eq.s32.totalorder %s24, 1
      %p105 = por %p103, %p104
      %p106 = scmp.ne.s32.totalorder %s97, %s98
      %p107 = scmp.eq.s32.totalorder %s24, 0
      %p108 = por %p106, %p107
      %p109 = scmp.ne.s32.totalorder %s97, %s98
      %p110 = scmp.eq.s32.totalorder %s25, 1
      %p111 = por %p109, %p110
      %p113 = scmp.ne.s32.totalorder %s98, %s112
      %p114 = scmp.eq.s32.totalorder %s25, 0
      %p115 = por %p113, %p114
      %s117 = sadd.s32 %s116, 1
      %p120 = scmp.eq.s32.totalorder %s19, 1
      %p121 = scmp.ne.s32.totalorder %s116, %s118
      %p122 = scmp.eq.s32.totalorder %s19, 0
      %p123 = por %p121, %p122
      %p124 = scmp.ne.s32.totalorder %s116, %s118
      %p125 = scmp.eq.s32.totalorder %s24, 1
      %p126 = por %p124, %p125
      %p127 = scmp.ne.s32.totalorder %s118, %s119
      %p128 = scmp.eq.s32.totalorder %s24, 0
      %p129 = por %p127, %p128
      %p130 = scmp.ne.s32.totalorder %s118, %s119
      %p131 = scmp.eq.s32.totalorder %s25, 1
      %p132 = por %p130, %p131
      %p134 = scmp.ne.s32.totalorder %s119, %s133
      %p135 = scmp.eq.s32.totalorder %s25, 0
      %p136 = por %p134, %p135
      %s137 = ssub.s32 %s19, %s26
      %p138 = scmp.eq.s32.totalorder %s137, 0
      %s140 = sadd.s32 %s139, 1
      %s141 = scalar_select %p138, %s139, %s140
      %p144 = pneg %p138
      %p145 = scmp.eq.s32.totalorder %s19, 1
      %p146 = por %p144, %p145
      %p147 = scmp.ne.s32.totalorder %s139, %s142
      %p148 = scmp.eq.s32.totalorder %s19, 0
      %p149 = por %p147, %p148
      %p150 = scmp.ne.s32.totalorder %s139, %s142
      %p151 = scmp.eq.s32.totalorder %s24, 1
      %p152 = por %p150, %p151
      %p153 = scmp.ne.s32.totalorder %s142, %s143
      %p154 = scmp.eq.s32.totalorder %s24, 0
      %p155 = por %p153, %p154
      %p156 = scmp.ne.s32.totalorder %s142, %s143
      %p157 = scmp.eq.s32.totalorder %s25, 1
      %p158 = por %p156, %p157
      %p160 = scmp.ne.s32.totalorder %s143, %s159
      %p161 = scmp.eq.s32.totalorder %s25, 0
      %p162 = por %p160, %p161
      %p163 = scmp.le.s32.totalorder 1, %s19
      %p164 = scmp.lt.s32.totalorder %s19, 3
      %p165 = pnand %p163, %p164
      %p166 = pneg %p165
      // Predicated region
      $region9: #{tpu_custom_call.1} parent=5 // pred_check
        _
      $region10: #{tpu_custom_call.1} parent=5 // pred_check_branch
        %168 = sbr.rel (%p165) target = $region12
      $region11: #{tpu_custom_call.1} parent=5 // pred_region
        %s169 = ssub.s32 %s19, 1
        // Predicated region
        $region13: #{tpu_custom_call.1} parent=11 // pred_check
          %p170 = pneg %p66
        $region14: #{tpu_custom_call.1} parent=11 // pred_check_branch
          %172 = sbr.rel (%p170) target = $region16
        $region15: #{tpu_custom_call.1} parent=11 // pred_region
          %174 = vsyncadd [#allocation6], 0
          %s175 = sshll.u32 %s1, 4
          %s176 = int_to_ptr.hbm [resolvable:$true] %s175
          %s177 = sshll.u32 [#allocation5], 4
          %s178 = int_to_ptr.vmem [resolvable:$true] %s177
          %183 = dma.hbm_to_vmem [thread:$0]  %s176, 4096, %s178, [#allocation6], 128, 128, 8
        $region16: #{tpu_custom_call.1} parent=11 // pred_fallthru
          _
        // Predicated region
        $region17: #{tpu_custom_call.1} parent=11 // pred_check
          %p184 = pneg %p87
        $region18: #{tpu_custom_call.1} parent=11 // pred_check_branch
          %186 = sbr.rel (%p184) target = $region20
        $region19: #{tpu_custom_call.1} parent=11 // pred_region
          %188 = vsyncadd [#allocation6], 0
          %s190 = sshll.u32 %s2, 4
          %s191 = int_to_ptr.hbm [resolvable:$true] %s190
          %s192 = sshll.u32 [#allocation7], 4
          %s193 = int_to_ptr.vmem [resolvable:$true] %s192
          %195 = dma.hbm_to_vmem [thread:$0]  %s191, 32, %s193, [#allocation6]
        $region20: #{tpu_custom_call.1} parent=11 // pred_fallthru
          _
        // Predicated region
        $region21: #{tpu_custom_call.1} parent=11 // pred_check
          %p196 = pneg %p108
        $region22: #{tpu_custom_call.1} parent=11 // pred_check_branch
          %198 = sbr.rel (%p196) target = $region24
        $region23: #{tpu_custom_call.1} parent=11 // pred_region
          %200 = vsyncadd [#allocation9], 0
          %s201 = sshll.u32 %s3, 4
          %s202 = int_to_ptr.hbm [resolvable:$true] %s201
          %s203 = sshll.u32 [#allocation8], 4
          %s204 = int_to_ptr.vmem [resolvable:$true] %s203
          %209 = dma.hbm_to_vmem [thread:$0]  %s202, 4096, %s204, [#allocation9], 128, 128, 8
        $region24: #{tpu_custom_call.1} parent=11 // pred_fallthru
          _
        // Predicated region
        $region25: #{tpu_custom_call.1} parent=11 // pred_check
          %p210 = pneg %p129
        $region26: #{tpu_custom_call.1} parent=11 // pred_check_branch
          %212 = sbr.rel (%p210) target = $region28
        $region27: #{tpu_custom_call.1} parent=11 // pred_region
          _
        $region28: #{tpu_custom_call.1} parent=11 // pred_fallthru
          _
      $region12: #{tpu_custom_call.1} parent=5 // pred_fallthru
        _
      %p213 = scmp.lt.s32.totalorder %s19, 2
      // Predicated region
      $region29: #{tpu_custom_call.1} parent=5 // pred_check
        %p214 = pneg %p213
      $region30: #{tpu_custom_call.1} parent=5 // pred_check_branch
        %216 = sbr.rel (%p214) target = $region32
      $region31: #{tpu_custom_call.1} parent=5 // pred_region
        // Predicated region
        $region33: #{tpu_custom_call.1} parent=31 // pred_check
          %p217 = pneg %p39
        $region34: #{tpu_custom_call.1} parent=31 // pred_check_branch
          %219 = sbr.rel (%p217) target = $region36
        $region35: #{tpu_custom_call.1} parent=31 // pred_region
          %s220 = sand.u32 %s29, 1
          %s221 = scalar_lea.sflag [#allocation3], %s220
          %s222 = sand.u32 %s29, 1
          %s223 = smul.addr %s222, 256
          %s224 = scalar_lea.vmem [#allocation2], %s223
          %s225 = smul.u32 16, %s19
          %227 = vsyncadd %s221, 0
          %s228 = smul.addr %s225, 2
          %s229 = smul.addr %s228, 8
          %s230 = scalar_lea.hbm %s0, %s229
          %s231 = sshll.u32 %s230, 4
          %s232 = int_to_ptr.hbm [resolvable:$true] %s231
          %s233 = sshll.u32 %s224, 4
          %s234 = int_to_ptr.vmem [resolvable:$true] %s233
          %239 = dma.hbm_to_vmem [thread:$0]  %s232, 4096, %s234, %s221, 256, 256, 16
        $region36: #{tpu_custom_call.1} parent=31 // pred_fallthru
          _
      $region32: #{tpu_custom_call.1} parent=5 // pred_fallthru
        _
      %p240 = scmp.le.s32.totalorder 1, %s19
      %p241 = scmp.lt.s32.totalorder %s19, 3
      %p242 = pnand %p240, %p241
      %p243 = pneg %p242
      // Predicated region
      $region37: #{tpu_custom_call.1} parent=5 // pred_check
        _
      $region38: #{tpu_custom_call.1} parent=5 // pred_check_branch
        %245 = sbr.rel (%p242) target = $region40
      $region39: #{tpu_custom_call.1} parent=5 // pred_region
        %s246 = ssub.s32 %s19, 1
        %s247 = sand.u32 %s32, 1
        %s248 = scalar_lea.sflag [#allocation3], %s247
        %s249 = sand.u32 %s32, 1
        %s250 = smul.addr %s249, 256
        %s251 = scalar_lea.vmem [#allocation2], %s250
        // Predicated region
        $region41: #{tpu_custom_call.1} parent=39 // pred_check
          %p252 = pneg %p45
        $region42: #{tpu_custom_call.1} parent=39 // pred_check_branch
          %254 = sbr.rel (%p252) target = $region44
        $region43: #{tpu_custom_call.1} parent=39 // pred_region
          %256 = dma.done %s248, 4096
        $region44: #{tpu_custom_call.1} parent=39 // pred_fallthru
          _
        // Predicated region
        $region45: #{tpu_custom_call.1} parent=39 // pred_check
          %p257 = pneg %p66
        $region46: #{tpu_custom_call.1} parent=39 // pred_check_branch
          %259 = sbr.rel (%p257) target = $region48
        $region47: #{tpu_custom_call.1} parent=39 // pred_region
          %261 = dma.done [#allocation6], 4096
        $region48: #{tpu_custom_call.1} parent=39 // pred_fallthru
          _
        // Predicated region
        $region49: #{tpu_custom_call.1} parent=39 // pred_check
          %p262 = pneg %p87
        $region50: #{tpu_custom_call.1} parent=39 // pred_check_branch
          %264 = sbr.rel (%p262) target = $region52
        $region51: #{tpu_custom_call.1} parent=39 // pred_region
          %266 = dma.done [#allocation6], 32
        $region52: #{tpu_custom_call.1} parent=39 // pred_fallthru
          _
        // Predicated region
        $region53: #{tpu_custom_call.1} parent=39 // pred_check
          %p267 = pneg %p108
        $region54: #{tpu_custom_call.1} parent=39 // pred_check_branch
          %269 = sbr.rel (%p267) target = $region56
        $region55: #{tpu_custom_call.1} parent=39 // pred_region
          %271 = dma.done [#allocation9], 4096
        $region56: #{tpu_custom_call.1} parent=39 // pred_fallthru
          _
        %s272 = sand.u32 %s32, 1
        %s273 = scalar_lea.sflag [#allocation3], %s272
        %s274 = sand.u32 %s32, 1
        %s275 = smul.addr %s274, 256
        %s276 = scalar_lea.vmem [#allocation2], %s275
        %p277 = pneg %p45
        %p278 = pneg %p42
        %p279 = pneg %p66
        %p280 = pneg %p63
        %p281 = pneg %p87
        %p282 = pneg %p84
        %p283 = pneg %p108
        %p284 = pneg %p105
        %p285 = pneg %p129
        %p286 = pneg %p126
        %p287 = pneg %p155
        %p288 = pneg %p152
        %s289 = sand.u32 %s142, 1
        %s290 = scalar_lea.sflag [#allocation4], %s289
        %s291 = sand.u32 %s142, 1
        %s292 = smul.addr %s291, 256
        %s293 = scalar_lea.vmem [#allocation10], %s292
        %s294 = smul.u32 16, %s24
        %s295 = smul.u32 16, %s24
        %v296 = vld [vmem:[%s251] sm:$0xff]
        %v297 = vld [vmem:[%s251 + $0x8] sm:$0xff]
        %v298 = vld [vmem:[%s251 + $0x10] sm:$0xff]
        %v299 = vld [vmem:[%s251 + $0x18] sm:$0xff]
        %v300 = vld [vmem:[%s251 + $0x20] sm:$0xff]
        %v301 = vld [vmem:[%s251 + $0x28] sm:$0xff]
        %v302 = vld [vmem:[%s251 + $0x30] sm:$0xff]
        %v303 = vld [vmem:[%s251 + $0x38] sm:$0xff]
        %v304 = vld [vmem:[%s251 + $0x40] sm:$0xff]
        %v305 = vld [vmem:[%s251 + $0x48] sm:$0xff]
        %v306 = vld [vmem:[%s251 + $0x50] sm:$0xff]
        %v307 = vld [vmem:[%s251 + $0x58] sm:$0xff]
        %v308 = vld [vmem:[%s251 + $0x60] sm:$0xff]
        %v309 = vld [vmem:[%s251 + $0x68] sm:$0xff]
        %v310 = vld [vmem:[%s251 + $0x70] sm:$0xff]
        %v311 = vld [vmem:[%s251 + $0x78] sm:$0xff]
        %v312 = vld [vmem:[%s251 + $0x80] sm:$0xff]
        %v313 = vld [vmem:[%s251 + $0x88] sm:$0xff]
        %v314 = vld [vmem:[%s251 + $0x90] sm:$0xff]
        %v315 = vld [vmem:[%s251 + $0x98] sm:$0xff]
        %v316 = vld [vmem:[%s251 + $0xa0] sm:$0xff]
        %v317 = vld [vmem:[%s251 + $0xa8] sm:$0xff]
        %v318 = vld [vmem:[%s251 + $0xb0] sm:$0xff]
        %v319 = vld [vmem:[%s251 + $0xb8] sm:$0xff]
        %v320 = vld [vmem:[%s251 + $0xc0] sm:$0xff]
        %v321 = vld [vmem:[%s251 + $0xc8] sm:$0xff]
        %v322 = vld [vmem:[%s251 + $0xd0] sm:$0xff]
        %v323 = vld [vmem:[%s251 + $0xd8] sm:$0xff]
        %v324 = vld [vmem:[%s251 + $0xe0] sm:$0xff]
        %v325 = vld [vmem:[%s251 + $0xe8] sm:$0xff]
        %v326 = vld [vmem:[%s251 + $0xf0] sm:$0xff]
        %v327 = vld [vmem:[%s251 + $0xf8] sm:$0xff]
        %v328 = vpack.c.bf16 %v298, %v296
        %v329 = vpack.c.bf16 %v299, %v297
        %v330 = vpack.c.bf16 %v302, %v300
        %v331 = vpack.c.bf16 %v303, %v301
        %v332 = vpack.c.bf16 %v306, %v304
        %v333 = vpack.c.bf16 %v307, %v305
        %v334 = vpack.c.bf16 %v310, %v308
        %v335 = vpack.c.bf16 %v311, %v309
        %v336 = vpack.c.bf16 %v314, %v312
        %v337 = vpack.c.bf16 %v315, %v313
        %v338 = vpack.c.bf16 %v318, %v316
        %v339 = vpack.c.bf16 %v319, %v317
        %v340 = vpack.c.bf16 %v322, %v320
        %v341 = vpack.c.bf16 %v323, %v321
        %v342 = vpack.c.bf16 %v326, %v324
        %v343 = vpack.c.bf16 %v327, %v325
        %v344 = vld [vmem:[#allocation5] sm:$0xff]
        %v345 = vld [vmem:[#allocation5 + $0x8] sm:$0xff]
        %v346 = vld [vmem:[#allocation5 + $0x10] sm:$0xff]
        %v347 = vld [vmem:[#allocation5 + $0x18] sm:$0xff]
        %v348 = vld [vmem:[#allocation5 + $0x20] sm:$0xff]
        %v349 = vld [vmem:[#allocation5 + $0x28] sm:$0xff]
        %v350 = vld [vmem:[#allocation5 + $0x30] sm:$0xff]
        %v351 = vld [vmem:[#allocation5 + $0x38] sm:$0xff]
        %v352 = vld [vmem:[#allocation5 + $0x40] sm:$0xff]
        %v353 = vld [vmem:[#allocation5 + $0x48] sm:$0xff]
        %v354 = vld [vmem:[#allocation5 + $0x50] sm:$0xff]
        %v355 = vld [vmem:[#allocation5 + $0x58] sm:$0xff]
        %v356 = vld [vmem:[#allocation5 + $0x60] sm:$0xff]
        %v357 = vld [vmem:[#allocation5 + $0x68] sm:$0xff]
        %v358 = vld [vmem:[#allocation5 + $0x70] sm:$0xff]
        %v359 = vld [vmem:[#allocation5 + $0x78] sm:$0xff]
        %v360 = vld [vmem:[#allocation5 + $0x80] sm:$0xff]
        %v361 = vld [vmem:[#allocation5 + $0x88] sm:$0xff]
        %v362 = vld [vmem:[#allocation5 + $0x90] sm:$0xff]
        %v363 = vld [vmem:[#allocation5 + $0x98] sm:$0xff]
        %v364 = vld [vmem:[#allocation5 + $0xa0] sm:$0xff]
        %v365 = vld [vmem:[#allocation5 + $0xa8] sm:$0xff]
        %v366 = vld [vmem:[#allocation5 + $0xb0] sm:$0xff]
        %v367 = vld [vmem:[#allocation5 + $0xb8] sm:$0xff]
        %v368 = vld [vmem:[#allocation5 + $0xc0] sm:$0xff]
        %v369 = vld [vmem:[#allocation5 + $0xc8] sm:$0xff]
        %v370 = vld [vmem:[#allocation5 + $0xd0] sm:$0xff]
        %v371 = vld [vmem:[#allocation5 + $0xd8] sm:$0xff]
        %v372 = vld [vmem:[#allocation5 + $0xe0] sm:$0xff]
        %v373 = vld [vmem:[#allocation5 + $0xe8] sm:$0xff]
        %v374 = vld [vmem:[#allocation5 + $0xf0] sm:$0xff]
        %v375 = vld [vmem:[#allocation5 + $0xf8] sm:$0xff]
        %v376 = vld [vmem:[#allocation7] sm:$0x3]
        %v378 = vperm.slane %v376, 0
        %v379 = vperm.slane %v376, 1
        %v414 = vunpack.c.l.b16 %v344
        %v415 = vunpack.c.h.b16 %v344
        %v416 = vunpack.c.l.b16 %v345
        %v417 = vunpack.c.h.b16 %v345
        %v418 = vunpack.c.l.b16 %v346
        %v419 = vunpack.c.h.b16 %v346
        %v420 = vunpack.c.l.b16 %v347
        %v421 = vunpack.c.h.b16 %v347
        %v422 = vunpack.c.l.b16 %v348
        %v423 = vunpack.c.h.b16 %v348
        %v424 = vunpack.c.l.b16 %v349
        %v425 = vunpack.c.h.b16 %v349
        %v426 = vunpack.c.l.b16 %v350
        %v427 = vunpack.c.h.b16 %v350
        %v428 = vunpack.c.l.b16 %v351
        %v429 = vunpack.c.h.b16 %v351
        %v430 = vunpack.c.l.b16 %v352
        %v431 = vunpack.c.h.b16 %v352
        %v432 = vunpack.c.l.b16 %v353
        %v433 = vunpack.c.h.b16 %v353
        %v434 = vunpack.c.l.b16 %v354
        %v435 = vunpack.c.h.b16 %v354
        %v436 = vunpack.c.l.b16 %v355
        %v437 = vunpack.c.h.b16 %v355
        %v438 = vunpack.c.l.b16 %v356
        %v439 = vunpack.c.h.b16 %v356
        %v440 = vunpack.c.l.b16 %v357
        %v441 = vunpack.c.h.b16 %v357
        %v442 = vunpack.c.l.b16 %v358
        %v443 = vunpack.c.h.b16 %v358
        %v444 = vunpack.c.l.b16 %v359
        %v445 = vunpack.c.h.b16 %v359
        %v446 = vunpack.c.l.b16 %v360
        %v447 = vunpack.c.h.b16 %v360
        %v448 = vunpack.c.l.b16 %v361
        %v449 = vunpack.c.h.b16 %v361
        %v450 = vunpack.c.l.b16 %v362
        %v451 = vunpack.c.h.b16 %v362
        %v452 = vunpack.c.l.b16 %v363
        %v453 = vunpack.c.h.b16 %v363
        %v454 = vunpack.c.l.b16 %v364
        %v455 = vunpack.c.h.b16 %v364
        %v456 = vunpack.c.l.b16 %v365
        %v457 = vunpack.c.h.b16 %v365
        %v458 = vunpack.c.l.b16 %v366
        %v459 = vunpack.c.h.b16 %v366
        %v460 = vunpack.c.l.b16 %v367
        %v461 = vunpack.c.h.b16 %v367
        %v462 = vunpack.c.l.b16 %v368
        %v463 = vunpack.c.h.b16 %v368
        %v464 = vunpack.c.l.b16 %v369
        %v465 = vunpack.c.h.b16 %v369
        %v466 = vunpack.c.l.b16 %v370
        %v467 = vunpack.c.h.b16 %v370
        %v468 = vunpack.c.l.b16 %v371
        %v469 = vunpack.c.h.b16 %v371
        %v470 = vunpack.c.l.b16 %v372
        %v471 = vunpack.c.h.b16 %v372
        %v472 = vunpack.c.l.b16 %v373
        %v473 = vunpack.c.h.b16 %v373
        %v474 = vunpack.c.l.b16 %v374
        %v475 = vunpack.c.h.b16 %v374
        %v476 = vunpack.c.l.b16 %v375
        %v477 = vunpack.c.h.b16 %v375
        %v478 = vpack.c.b16 %v416, %v414
        %v479 = vpack.c.b16 %v417, %v415
        %v480 = vpack.c.b16 %v420, %v418
        %v481 = vpack.c.b16 %v421, %v419
        %v482 = vpack.c.b16 %v424, %v422
        %v483 = vpack.c.b16 %v425, %v423
        %v484 = vpack.c.b16 %v428, %v426
        %v485 = vpack.c.b16 %v429, %v427
        %v486 = vpack.c.b16 %v432, %v430
        %v487 = vpack.c.b16 %v433, %v431
        %v488 = vpack.c.b16 %v436, %v434
        %v489 = vpack.c.b16 %v437, %v435
        %v490 = vpack.c.b16 %v440, %v438
        %v491 = vpack.c.b16 %v441, %v439
        %v492 = vpack.c.b16 %v444, %v442
        %v493 = vpack.c.b16 %v445, %v443
        %v494 = vpack.c.b16 %v448, %v446
        %v495 = vpack.c.b16 %v449, %v447
        %v496 = vpack.c.b16 %v452, %v450
        %v497 = vpack.c.b16 %v453, %v451
        %v498 = vpack.c.b16 %v456, %v454
        %v499 = vpack.c.b16 %v457, %v455
        %v500 = vpack.c.b16 %v460, %v458
        %v501 = vpack.c.b16 %v461, %v459
        %v502 = vpack.c.b16 %v464, %v462
        %v503 = vpack.c.b16 %v465, %v463
        %v504 = vpack.c.b16 %v468, %v466
        %v505 = vpack.c.b16 %v469, %v467
        %v506 = vpack.c.b16 %v472, %v470
        %v507 = vpack.c.b16 %v473, %v471
        %v508 = vpack.c.b16 %v476, %v474
        %v509 = vpack.c.b16 %v477, %v475
        %542 = vmatpush.bf16.msra.mxu0 %v492
        %543 = vmatpush.bf16.msra.mxu0 %v490
        %544 = vmatpush.bf16.msra.mxu0 %v488
        %545 = vmatpush.bf16.msra.mxu0 %v486
        %546 = vmatpush.bf16.msra.mxu0 %v484
        %547 = vmatpush.bf16.msra.mxu0 %v482
        %548 = vmatpush.bf16.msra.mxu0 %v480
        %549 = vmatpush.bf16.msra.mxu0 %v478
        %550 = vmatmul.bf16.gmra.mxu0 %v328
        %v551 = vpop.f32.mrf.mxu0
        %v552 = vadd.f32 %v378, %v551
        %v553 = vpop.f32.mrf.mxu0
        %v554 = vadd.f32 %v378, %v553
        %555 = vmatmul.bf16.gmra.mxu0 %v330
        %v556 = vpop.f32.mrf.mxu0
        %v557 = vadd.f32 %v378, %v556
        %v558 = vpop.f32.mrf.mxu0
        %v559 = vadd.f32 %v378, %v558
        %560 = vmatmul.bf16.gmra.mxu0 %v332
        %v561 = vpop.f32.mrf.mxu0
        %v562 = vadd.f32 %v378, %v561
        %v563 = vpop.f32.mrf.mxu0
        %v564 = vadd.f32 %v378, %v563
        %565 = vmatmul.bf16.gmra.mxu0 %v334
        %v566 = vpop.f32.mrf.mxu0
        %v567 = vadd.f32 %v378, %v566
        %v568 = vpop.f32.mrf.mxu0
        %v569 = vadd.f32 %v378, %v568
        %570 = vmatmul.bf16.gmra.mxu0 %v336
        %v571 = vpop.f32.mrf.mxu0
        %v572 = vadd.f32 %v378, %v571
        %v573 = vpop.f32.mrf.mxu0
        %v574 = vadd.f32 %v378, %v573
        %575 = vmatmul.bf16.gmra.mxu0 %v338
        %v576 = vpop.f32.mrf.mxu0
        %v577 = vadd.f32 %v378, %v576
        %v578 = vpop.f32.mrf.mxu0
        %v579 = vadd.f32 %v378, %v578
        %580 = vmatmul.bf16.gmra.mxu0 %v340
        %v581 = vpop.f32.mrf.mxu0
        %v582 = vadd.f32 %v378, %v581
        %v583 = vpop.f32.mrf.mxu0
        %v584 = vadd.f32 %v378, %v583
        %585 = vmatmul.bf16.gmra.mxu0 %v342
        %v586 = vpop.f32.mrf.mxu0
        %v587 = vadd.f32 %v378, %v586
        %v588 = vpop.f32.mrf.mxu0
        %v589 = vadd.f32 %v378, %v588
        %590 = vdwg.mxu0
        %591 = vmatpush.bf16.msra.mxu0 %v508
        %592 = vmatpush.bf16.msra.mxu0 %v506
        %593 = vmatpush.bf16.msra.mxu0 %v504
        %594 = vmatpush.bf16.msra.mxu0 %v502
        %595 = vmatpush.bf16.msra.mxu0 %v500
        %596 = vmatpush.bf16.msra.mxu0 %v498
        %597 = vmatpush.bf16.msra.mxu0 %v496
        %598 = vmatpush.bf16.msra.mxu0 %v494
        %599 = vmatmul.bf16.gmra.mxu0 %v329
        %v600 = vpop.f32.mrf.mxu0
        %v601 = vadd.f32 %v552, %v600
        %v602 = vpop.f32.mrf.mxu0
        %v603 = vadd.f32 %v554, %v602
        %604 = vmatmul.bf16.gmra.mxu0 %v331
        %v605 = vpop.f32.mrf.mxu0
        %v606 = vadd.f32 %v557, %v605
        %v607 = vpop.f32.mrf.mxu0
        %v608 = vadd.f32 %v559, %v607
        %609 = vmatmul.bf16.gmra.mxu0 %v333
        %v610 = vpop.f32.mrf.mxu0
        %v611 = vadd.f32 %v562, %v610
        %v612 = vpop.f32.mrf.mxu0
        %v613 = vadd.f32 %v564, %v612
        %614 = vmatmul.bf16.gmra.mxu0 %v335
        %v615 = vpop.f32.mrf.mxu0
        %v616 = vadd.f32 %v567, %v615
        %v617 = vpop.f32.mrf.mxu0
        %v618 = vadd.f32 %v569, %v617
        %619 = vmatmul.bf16.gmra.mxu0 %v337
        %v620 = vpop.f32.mrf.mxu0
        %v621 = vadd.f32 %v572, %v620
        %v622 = vpop.f32.mrf.mxu0
        %v623 = vadd.f32 %v574, %v622
        %624 = vmatmul.bf16.gmra.mxu0 %v339
        %v625 = vpop.f32.mrf.mxu0
        %v626 = vadd.f32 %v577, %v625
        %v627 = vpop.f32.mrf.mxu0
        %v628 = vadd.f32 %v579, %v627
        %629 = vmatmul.bf16.gmra.mxu0 %v341
        %v630 = vpop.f32.mrf.mxu0
        %v631 = vadd.f32 %v582, %v630
        %v632 = vpop.f32.mrf.mxu0
        %v633 = vadd.f32 %v584, %v632
        %634 = vmatmul.bf16.gmra.mxu0 %v343
        %v635 = vpop.f32.mrf.mxu0
        %v636 = vadd.f32 %v587, %v635
        %v637 = vpop.f32.mrf.mxu0
        %v638 = vadd.f32 %v589, %v637
        %639 = vdwg.mxu0
        %640 = vmatpush.bf16.msra.mxu0 %v493
        %641 = vmatpush.bf16.msra.mxu0 %v491
        %642 = vmatpush.bf16.msra.mxu0 %v489
        %643 = vmatpush.bf16.msra.mxu0 %v487
        %644 = vmatpush.bf16.msra.mxu0 %v485
        %645 = vmatpush.bf16.msra.mxu0 %v483
        %646 = vmatpush.bf16.msra.mxu0 %v481
        %647 = vmatpush.bf16.msra.mxu0 %v479
        %648 = vmatmul.bf16.gmra.mxu0 %v328
        %v649 = vpop.f32.mrf.mxu0
        %v650 = vadd.f32 %v379, %v649
        %v651 = vpop.f32.mrf.mxu0
        %v652 = vadd.f32 %v379, %v651
        %653 = vmatmul.bf16.gmra.mxu0 %v330
        %v654 = vpop.f32.mrf.mxu0
        %v655 = vadd.f32 %v379, %v654
        %v656 = vpop.f32.mrf.mxu0
        %v657 = vadd.f32 %v379, %v656
        %658 = vmatmul.bf16.gmra.mxu0 %v332
        %v659 = vpop.f32.mrf.mxu0
        %v660 = vadd.f32 %v379, %v659
        %v661 = vpop.f32.mrf.mxu0
        %v662 = vadd.f32 %v379, %v661
        %663 = vmatmul.bf16.gmra.mxu0 %v334
        %v664 = vpop.f32.mrf.mxu0
        %v665 = vadd.f32 %v379, %v664
        %v666 = vpop.f32.mrf.mxu0
        %v667 = vadd.f32 %v379, %v666
        %668 = vmatmul.bf16.gmra.mxu0 %v336
        %v669 = vpop.f32.mrf.mxu0
        %v670 = vadd.f32 %v379, %v669
        %v671 = vpop.f32.mrf.mxu0
        %v672 = vadd.f32 %v379, %v671
        %673 = vmatmul.bf16.gmra.mxu0 %v338
        %v674 = vpop.f32.mrf.mxu0
        %v675 = vadd.f32 %v379, %v674
        %v676 = vpop.f32.mrf.mxu0
        %v677 = vadd.f32 %v379, %v676
        %678 = vmatmul.bf16.gmra.mxu0 %v340
        %v679 = vpop.f32.mrf.mxu0
        %v680 = vadd.f32 %v379, %v679
        %v681 = vpop.f32.mrf.mxu0
        %v682 = vadd.f32 %v379, %v681
        %683 = vmatmul.bf16.gmra.mxu0 %v342
        %v684 = vpop.f32.mrf.mxu0
        %v685 = vadd.f32 %v379, %v684
        %v686 = vpop.f32.mrf.mxu0
        %v687 = vadd.f32 %v379, %v686
        %688 = vdwg.mxu0
        %689 = vmatpush.bf16.msra.mxu0 %v509
        %690 = vmatpush.bf16.msra.mxu0 %v507
        %691 = vmatpush.bf16.msra.mxu0 %v505
        %692 = vmatpush.bf16.msra.mxu0 %v503
        %693 = vmatpush.bf16.msra.mxu0 %v501
        %694 = vmatpush.bf16.msra.mxu0 %v499
        %695 = vmatpush.bf16.msra.mxu0 %v497
        %696 = vmatpush.bf16.msra.mxu0 %v495
        %697 = vmatmul.bf16.gmra.mxu0 %v329
        %v698 = vpop.f32.mrf.mxu0
        %v699 = vadd.f32 %v650, %v698
        %v700 = vpop.f32.mrf.mxu0
        %v701 = vadd.f32 %v652, %v700
        %702 = vmatmul.bf16.gmra.mxu0 %v331
        %v703 = vpop.f32.mrf.mxu0
        %v704 = vadd.f32 %v655, %v703
        %v705 = vpop.f32.mrf.mxu0
        %v706 = vadd.f32 %v657, %v705
        %707 = vmatmul.bf16.gmra.mxu0 %v333
        %v708 = vpop.f32.mrf.mxu0
        %v709 = vadd.f32 %v660, %v708
        %v710 = vpop.f32.mrf.mxu0
        %v711 = vadd.f32 %v662, %v710
        %712 = vmatmul.bf16.gmra.mxu0 %v335
        %v713 = vpop.f32.mrf.mxu0
        %v714 = vadd.f32 %v665, %v713
        %v715 = vpop.f32.mrf.mxu0
        %v716 = vadd.f32 %v667, %v715
        %717 = vmatmul.bf16.gmra.mxu0 %v337
        %v718 = vpop.f32.mrf.mxu0
        %v719 = vadd.f32 %v670, %v718
        %v720 = vpop.f32.mrf.mxu0
        %v721 = vadd.f32 %v672, %v720
        %722 = vmatmul.bf16.gmra.mxu0 %v339
        %v723 = vpop.f32.mrf.mxu0
        %v724 = vadd.f32 %v675, %v723
        %v725 = vpop.f32.mrf.mxu0
        %v726 = vadd.f32 %v677, %v725
        %727 = vmatmul.bf16.gmra.mxu0 %v341
        %v728 = vpop.f32.mrf.mxu0
        %v729 = vadd.f32 %v680, %v728
        %v730 = vpop.f32.mrf.mxu0
        %v731 = vadd.f32 %v682, %v730
        %732 = vmatmul.bf16.gmra.mxu0 %v343
        %v733 = vpop.f32.mrf.mxu0
        %v734 = vadd.f32 %v685, %v733
        %v735 = vpop.f32.mrf.mxu0
        %v736 = vadd.f32 %v687, %v735
        %737 = vdwg.mxu0
        %v738 = vpack.c.bf16 %v603, %v601
        %v739 = vpack.c.bf16 %v701, %v699
        %v740 = vpack.c.bf16 %v608, %v606
        %v741 = vpack.c.bf16 %v706, %v704
        %v742 = vpack.c.bf16 %v613, %v611
        %v743 = vpack.c.bf16 %v711, %v709
        %v744 = vpack.c.bf16 %v618, %v616
        %v745 = vpack.c.bf16 %v716, %v714
        %v746 = vpack.c.bf16 %v623, %v621
        %v747 = vpack.c.bf16 %v721, %v719
        %v748 = vpack.c.bf16 %v628, %v626
        %v749 = vpack.c.bf16 %v726, %v724
        %v750 = vpack.c.bf16 %v633, %v631
        %v751 = vpack.c.bf16 %v731, %v729
        %v752 = vpack.c.bf16 %v638, %v636
        %v753 = vpack.c.bf16 %v736, %v734
        %v754 = vld [vmem:[#allocation8] sm:$0xff]
        %v755 = vld [vmem:[#allocation8 + $0x8] sm:$0xff]
        %v756 = vld [vmem:[#allocation8 + $0x10] sm:$0xff]
        %v757 = vld [vmem:[#allocation8 + $0x18] sm:$0xff]
        %v758 = vld [vmem:[#allocation8 + $0x20] sm:$0xff]
        %v759 = vld [vmem:[#allocation8 + $0x28] sm:$0xff]
        %v760 = vld [vmem:[#allocation8 + $0x30] sm:$0xff]
        %v761 = vld [vmem:[#allocation8 + $0x38] sm:$0xff]
        %v762 = vld [vmem:[#allocation8 + $0x40] sm:$0xff]
        %v763 = vld [vmem:[#allocation8 + $0x48] sm:$0xff]
        %v764 = vld [vmem:[#allocation8 + $0x50] sm:$0xff]
        %v765 = vld [vmem:[#allocation8 + $0x58] sm:$0xff]
        %v766 = vld [vmem:[#allocation8 + $0x60] sm:$0xff]
        %v767 = vld [vmem:[#allocation8 + $0x68] sm:$0xff]
        %v768 = vld [vmem:[#allocation8 + $0x70] sm:$0xff]
        %v769 = vld [vmem:[#allocation8 + $0x78] sm:$0xff]
        %v770 = vld [vmem:[#allocation8 + $0x80] sm:$0xff]
        %v771 = vld [vmem:[#allocation8 + $0x88] sm:$0xff]
        %v772 = vld [vmem:[#allocation8 + $0x90] sm:$0xff]
        %v773 = vld [vmem:[#allocation8 + $0x98] sm:$0xff]
        %v774 = vld [vmem:[#allocation8 + $0xa0] sm:$0xff]
        %v775 = vld [vmem:[#allocation8 + $0xa8] sm:$0xff]
        %v776 = vld [vmem:[#allocation8 + $0xb0] sm:$0xff]
        %v777 = vld [vmem:[#allocation8 + $0xb8] sm:$0xff]
        %v778 = vld [vmem:[#allocation8 + $0xc0] sm:$0xff]
        %v779 = vld [vmem:[#allocation8 + $0xc8] sm:$0xff]
        %v780 = vld [vmem:[#allocation8 + $0xd0] sm:$0xff]
        %v781 = vld [vmem:[#allocation8 + $0xd8] sm:$0xff]
        %v782 = vld [vmem:[#allocation8 + $0xe0] sm:$0xff]
        %v783 = vld [vmem:[#allocation8 + $0xe8] sm:$0xff]
        %v784 = vld [vmem:[#allocation8 + $0xf0] sm:$0xff]
        %v785 = vld [vmem:[#allocation8 + $0xf8] sm:$0xff]
        %v786 = vld [vmem:[%s4] sm:$0x3]
        %v788 = vperm.slane %v786, 0
        %v789 = vperm.slane %v786, 1
        %v824 = vunpack.c.l.b16 %v754
        %v825 = vunpack.c.h.b16 %v754
        %v826 = vunpack.c.l.b16 %v755
        %v827 = vunpack.c.h.b16 %v755
        %v828 = vunpack.c.l.b16 %v756
        %v829 = vunpack.c.h.b16 %v756
        %v830 = vunpack.c.l.b16 %v757
        %v831 = vunpack.c.h.b16 %v757
        %v832 = vunpack.c.l.b16 %v758
        %v833 = vunpack.c.h.b16 %v758
        %v834 = vunpack.c.l.b16 %v759
        %v835 = vunpack.c.h.b16 %v759
        %v836 = vunpack.c.l.b16 %v760
        %v837 = vunpack.c.h.b16 %v760
        %v838 = vunpack.c.l.b16 %v761
        %v839 = vunpack.c.h.b16 %v761
        %v840 = vunpack.c.l.b16 %v762
        %v841 = vunpack.c.h.b16 %v762
        %v842 = vunpack.c.l.b16 %v763
        %v843 = vunpack.c.h.b16 %v763
        %v844 = vunpack.c.l.b16 %v764
        %v845 = vunpack.c.h.b16 %v764
        %v846 = vunpack.c.l.b16 %v765
        %v847 = vunpack.c.h.b16 %v765
        %v848 = vunpack.c.l.b16 %v766
        %v849 = vunpack.c.h.b16 %v766
        %v850 = vunpack.c.l.b16 %v767
        %v851 = vunpack.c.h.b16 %v767
        %v852 = vunpack.c.l.b16 %v768
        %v853 = vunpack.c.h.b16 %v768
        %v854 = vunpack.c.l.b16 %v769
        %v855 = vunpack.c.h.b16 %v769
        %v856 = vunpack.c.l.b16 %v770
        %v857 = vunpack.c.h.b16 %v770
        %v858 = vunpack.c.l.b16 %v771
        %v859 = vunpack.c.h.b16 %v771
        %v860 = vunpack.c.l.b16 %v772
        %v861 = vunpack.c.h.b16 %v772
        %v862 = vunpack.c.l.b16 %v773
        %v863 = vunpack.c.h.b16 %v773
        %v864 = vunpack.c.l.b16 %v774
        %v865 = vunpack.c.h.b16 %v774
        %v866 = vunpack.c.l.b16 %v775
        %v867 = vunpack.c.h.b16 %v775
        %v868 = vunpack.c.l.b16 %v776
        %v869 = vunpack.c.h.b16 %v776
        %v870 = vunpack.c.l.b16 %v777
        %v871 = vunpack.c.h.b16 %v777
        %v872 = vunpack.c.l.b16 %v778
        %v873 = vunpack.c.h.b16 %v778
        %v874 = vunpack.c.l.b16 %v779
        %v875 = vunpack.c.h.b16 %v779
        %v876 = vunpack.c.l.b16 %v780
        %v877 = vunpack.c.h.b16 %v780
        %v878 = vunpack.c.l.b16 %v781
        %v879 = vunpack.c.h.b16 %v781
        %v880 = vunpack.c.l.b16 %v782
        %v881 = vunpack.c.h.b16 %v782
        %v882 = vunpack.c.l.b16 %v783
        %v883 = vunpack.c.h.b16 %v783
        %v884 = vunpack.c.l.b16 %v784
        %v885 = vunpack.c.h.b16 %v784
        %v886 = vunpack.c.l.b16 %v785
        %v887 = vunpack.c.h.b16 %v785
        %v888 = vpack.c.b16 %v826, %v824
        %v889 = vpack.c.b16 %v827, %v825
        %v890 = vpack.c.b16 %v830, %v828
        %v891 = vpack.c.b16 %v831, %v829
        %v892 = vpack.c.b16 %v834, %v832
        %v893 = vpack.c.b16 %v835, %v833
        %v894 = vpack.c.b16 %v838, %v836
        %v895 = vpack.c.b16 %v839, %v837
        %v896 = vpack.c.b16 %v842, %v840
        %v897 = vpack.c.b16 %v843, %v841
        %v898 = vpack.c.b16 %v846, %v844
        %v899 = vpack.c.b16 %v847, %v845
        %v900 = vpack.c.b16 %v850, %v848
        %v901 = vpack.c.b16 %v851, %v849
        %v902 = vpack.c.b16 %v854, %v852
        %v903 = vpack.c.b16 %v855, %v853
        %v904 = vpack.c.b16 %v858, %v856
        %v905 = vpack.c.b16 %v859, %v857
        %v906 = vpack.c.b16 %v862, %v860
        %v907 = vpack.c.b16 %v863, %v861
        %v908 = vpack.c.b16 %v866, %v864
        %v909 = vpack.c.b16 %v867, %v865
        %v910 = vpack.c.b16 %v870, %v868
        %v911 = vpack.c.b16 %v871, %v869
        %v912 = vpack.c.b16 %v874, %v872
        %v913 = vpack.c.b16 %v875, %v873
        %v914 = vpack.c.b16 %v878, %v876
        %v915 = vpack.c.b16 %v879, %v877
        %v916 = vpack.c.b16 %v882, %v880
        %v917 = vpack.c.b16 %v883, %v881
        %v918 = vpack.c.b16 %v886, %v884
        %v919 = vpack.c.b16 %v887, %v885
        %952 = vmatpush.bf16.msra.mxu0 %v902
        %953 = vmatpush.bf16.msra.mxu0 %v900
        %954 = vmatpush.bf16.msra.mxu0 %v898
        %955 = vmatpush.bf16.msra.mxu0 %v896
        %956 = vmatpush.bf16.msra.mxu0 %v894
        %957 = vmatpush.bf16.msra.mxu0 %v892
        %958 = vmatpush.bf16.msra.mxu0 %v890
        %959 = vmatpush.bf16.msra.mxu0 %v888
        %960 = vmatmul.bf16.gmra.mxu0 %v738
        %v961 = vpop.f32.mrf.mxu0
        %v962 = vadd.f32 %v788, %v961
        %v963 = vpop.f32.mrf.mxu0
        %v964 = vadd.f32 %v788, %v963
        %965 = vmatmul.bf16.gmra.mxu0 %v740
        %v966 = vpop.f32.mrf.mxu0
        %v967 = vadd.f32 %v788, %v966
        %v968 = vpop.f32.mrf.mxu0
        %v969 = vadd.f32 %v788, %v968
        %970 = vmatmul.bf16.gmra.mxu0 %v742
        %v971 = vpop.f32.mrf.mxu0
        %v972 = vadd.f32 %v788, %v971
        %v973 = vpop.f32.mrf.mxu0
        %v974 = vadd.f32 %v788, %v973
        %975 = vmatmul.bf16.gmra.mxu0 %v744
        %v976 = vpop.f32.mrf.mxu0
        %v977 = vadd.f32 %v788, %v976
        %v978 = vpop.f32.mrf.mxu0
        %v979 = vadd.f32 %v788, %v978
        %980 = vmatmul.bf16.gmra.mxu0 %v746
        %v981 = vpop.f32.mrf.mxu0
        %v982 = vadd.f32 %v788, %v981
        %v983 = vpop.f32.mrf.mxu0
        %v984 = vadd.f32 %v788, %v983
        %985 = vmatmul.bf16.gmra.mxu0 %v748
        %v986 = vpop.f32.mrf.mxu0
        %v987 = vadd.f32 %v788, %v986
        %v988 = vpop.f32.mrf.mxu0
        %v989 = vadd.f32 %v788, %v988
        %990 = vmatmul.bf16.gmra.mxu0 %v750
        %v991 = vpop.f32.mrf.mxu0
        %v992 = vadd.f32 %v788, %v991
        %v993 = vpop.f32.mrf.mxu0
        %v994 = vadd.f32 %v788, %v993
        %995 = vmatmul.bf16.gmra.mxu0 %v752
        %v996 = vpop.f32.mrf.mxu0
        %v997 = vadd.f32 %v788, %v996
        %v998 = vpop.f32.mrf.mxu0
        %v999 = vadd.f32 %v788, %v998
        %1000 = vdwg.mxu0
        %1001 = vmatpush.bf16.msra.mxu0 %v918
        %1002 = vmatpush.bf16.msra.mxu0 %v916
        %1003 = vmatpush.bf16.msra.mxu0 %v914
        %1004 = vmatpush.bf16.msra.mxu0 %v912
        %1005 = vmatpush.bf16.msra.mxu0 %v910
        %1006 = vmatpush.bf16.msra.mxu0 %v908
        %1007 = vmatpush.bf16.msra.mxu0 %v906
        %1008 = vmatpush.bf16.msra.mxu0 %v904
        %1009 = vmatmul.bf16.gmra.mxu0 %v739
        %v1010 = vpop.f32.mrf.mxu0
        %v1011 = vadd.f32 %v962, %v1010
        %v1012 = vpop.f32.mrf.mxu0
        %v1013 = vadd.f32 %v964, %v1012
        %1014 = vmatmul.bf16.gmra.mxu0 %v741
        %v1015 = vpop.f32.mrf.mxu0
        %v1016 = vadd.f32 %v967, %v1015
        %v1017 = vpop.f32.mrf.mxu0
        %v1018 = vadd.f32 %v969, %v1017
        %1019 = vmatmul.bf16.gmra.mxu0 %v743
        %v1020 = vpop.f32.mrf.mxu0
        %v1021 = vadd.f32 %v972, %v1020
        %v1022 = vpop.f32.mrf.mxu0
        %v1023 = vadd.f32 %v974, %v1022
        %1024 = vmatmul.bf16.gmra.mxu0 %v745
        %v1025 = vpop.f32.mrf.mxu0
        %v1026 = vadd.f32 %v977, %v1025
        %v1027 = vpop.f32.mrf.mxu0
        %v1028 = vadd.f32 %v979, %v1027
        %1029 = vmatmul.bf16.gmra.mxu0 %v747
        %v1030 = vpop.f32.mrf.mxu0
        %v1031 = vadd.f32 %v982, %v1030
        %v1032 = vpop.f32.mrf.mxu0
        %v1033 = vadd.f32 %v984, %v1032
        %1034 = vmatmul.bf16.gmra.mxu0 %v749
        %v1035 = vpop.f32.mrf.mxu0
        %v1036 = vadd.f32 %v987, %v1035
        %v1037 = vpop.f32.mrf.mxu0
        %v1038 = vadd.f32 %v989, %v1037
        %1039 = vmatmul.bf16.gmra.mxu0 %v751
        %v1040 = vpop.f32.mrf.mxu0
        %v1041 = vadd.f32 %v992, %v1040
        %v1042 = vpop.f32.mrf.mxu0
        %v1043 = vadd.f32 %v994, %v1042
        %1044 = vmatmul.bf16.gmra.mxu0 %v753
        %v1045 = vpop.f32.mrf.mxu0
        %v1046 = vadd.f32 %v997, %v1045
        %v1047 = vpop.f32.mrf.mxu0
        %v1048 = vadd.f32 %v999, %v1047
        %1049 = vdwg.mxu0
        %1050 = vmatpush.bf16.msra.mxu0 %v903
        %1051 = vmatpush.bf16.msra.mxu0 %v901
        %1052 = vmatpush.bf16.msra.mxu0 %v899
        %1053 = vmatpush.bf16.msra.mxu0 %v897
        %1054 = vmatpush.bf16.msra.mxu0 %v895
        %1055 = vmatpush.bf16.msra.mxu0 %v893
        %1056 = vmatpush.bf16.msra.mxu0 %v891
        %1057 = vmatpush.bf16.msra.mxu0 %v889
        %1058 = vmatmul.bf16.gmra.mxu0 %v738
        %v1059 = vpop.f32.mrf.mxu0
        %v1060 = vadd.f32 %v789, %v1059
        %v1061 = vpop.f32.mrf.mxu0
        %v1062 = vadd.f32 %v789, %v1061
        %1063 = vmatmul.bf16.gmra.mxu0 %v740
        %v1064 = vpop.f32.mrf.mxu0
        %v1065 = vadd.f32 %v789, %v1064
        %v1066 = vpop.f32.mrf.mxu0
        %v1067 = vadd.f32 %v789, %v1066
        %1068 = vmatmul.bf16.gmra.mxu0 %v742
        %v1069 = vpop.f32.mrf.mxu0
        %v1070 = vadd.f32 %v789, %v1069
        %v1071 = vpop.f32.mrf.mxu0
        %v1072 = vadd.f32 %v789, %v1071
        %1073 = vmatmul.bf16.gmra.mxu0 %v744
        %v1074 = vpop.f32.mrf.mxu0
        %v1075 = vadd.f32 %v789, %v1074
        %v1076 = vpop.f32.mrf.mxu0
        %v1077 = vadd.f32 %v789, %v1076
        %1078 = vmatmul.bf16.gmra.mxu0 %v746
        %v1079 = vpop.f32.mrf.mxu0
        %v1080 = vadd.f32 %v789, %v1079
        %v1081 = vpop.f32.mrf.mxu0
        %v1082 = vadd.f32 %v789, %v1081
        %1083 = vmatmul.bf16.gmra.mxu0 %v748
        %v1084 = vpop.f32.mrf.mxu0
        %v1085 = vadd.f32 %v789, %v1084
        %v1086 = vpop.f32.mrf.mxu0
        %v1087 = vadd.f32 %v789, %v1086
        %1088 = vmatmul.bf16.gmra.mxu0 %v750
        %v1089 = vpop.f32.mrf.mxu0
        %v1090 = vadd.f32 %v789, %v1089
        %v1091 = vpop.f32.mrf.mxu0
        %v1092 = vadd.f32 %v789, %v1091
        %1093 = vmatmul.bf16.gmra.mxu0 %v752
        %v1094 = vpop.f32.mrf.mxu0
        %v1095 = vadd.f32 %v789, %v1094
        %v1096 = vpop.f32.mrf.mxu0
        %v1097 = vadd.f32 %v789, %v1096
        %1098 = vdwg.mxu0
        %1099 = vmatpush.bf16.msra.mxu0 %v919
        %1100 = vmatpush.bf16.msra.mxu0 %v917
        %1101 = vmatpush.bf16.msra.mxu0 %v915
        %1102 = vmatpush.bf16.msra.mxu0 %v913
        %1103 = vmatpush.bf16.msra.mxu0 %v911
        %1104 = vmatpush.bf16.msra.mxu0 %v909
        %1105 = vmatpush.bf16.msra.mxu0 %v907
        %1106 = vmatpush.bf16.msra.mxu0 %v905
        %1107 = vmatmul.bf16.gmra.mxu0 %v739
        %v1108 = vpop.f32.mrf.mxu0
        %v1109 = vadd.f32 %v1060, %v1108
        %v1110 = vpop.f32.mrf.mxu0
        %v1111 = vadd.f32 %v1062, %v1110
        %1112 = vmatmul.bf16.gmra.mxu0 %v741
        %v1113 = vpop.f32.mrf.mxu0
        %v1114 = vadd.f32 %v1065, %v1113
        %v1115 = vpop.f32.mrf.mxu0
        %v1116 = vadd.f32 %v1067, %v1115
        %1117 = vmatmul.bf16.gmra.mxu0 %v743
        %v1118 = vpop.f32.mrf.mxu0
        %v1119 = vadd.f32 %v1070, %v1118
        %v1120 = vpop.f32.mrf.mxu0
        %v1121 = vadd.f32 %v1072, %v1120
        %1122 = vmatmul.bf16.gmra.mxu0 %v745
        %v1123 = vpop.f32.mrf.mxu0
        %v1124 = vadd.f32 %v1075, %v1123
        %v1125 = vpop.f32.mrf.mxu0
        %v1126 = vadd.f32 %v1077, %v1125
        %1127 = vmatmul.bf16.gmra.mxu0 %v747
        %v1128 = vpop.f32.mrf.mxu0
        %v1129 = vadd.f32 %v1080, %v1128
        %v1130 = vpop.f32.mrf.mxu0
        %v1131 = vadd.f32 %v1082, %v1130
        %1132 = vmatmul.bf16.gmra.mxu0 %v749
        %v1133 = vpop.f32.mrf.mxu0
        %v1134 = vadd.f32 %v1085, %v1133
        %v1135 = vpop.f32.mrf.mxu0
        %v1136 = vadd.f32 %v1087, %v1135
        %1137 = vmatmul.bf16.gmra.mxu0 %v751
        %v1138 = vpop.f32.mrf.mxu0
        %v1139 = vadd.f32 %v1090, %v1138
        %v1140 = vpop.f32.mrf.mxu0
        %v1141 = vadd.f32 %v1092, %v1140
        %1142 = vmatmul.bf16.gmra.mxu0 %v753
        %v1143 = vpop.f32.mrf.mxu0
        %v1144 = vadd.f32 %v1095, %v1143
        %v1145 = vpop.f32.mrf.mxu0
        %v1146 = vadd.f32 %v1097, %v1145
        %1147 = vdwg.mxu0
        %1148 = vst [vmem:[%s293] sm:$0xff] %v1011
        %1149 = vst [vmem:[%s293 + $0x8] sm:$0xff] %v1109
        %1150 = vst [vmem:[%s293 + $0x10] sm:$0xff] %v1013
        %1151 = vst [vmem:[%s293 + $0x18] sm:$0xff] %v1111
        %1152 = vst [vmem:[%s293 + $0x20] sm:$0xff] %v1016
        %1153 = vst [vmem:[%s293 + $0x28] sm:$0xff] %v1114
        %1154 = vst [vmem:[%s293 + $0x30] sm:$0xff] %v1018
        %1155 = vst [vmem:[%s293 + $0x38] sm:$0xff] %v1116
        %1156 = vst [vmem:[%s293 + $0x40] sm:$0xff] %v1021
        %1157 = vst [vmem:[%s293 + $0x48] sm:$0xff] %v1119
        %1158 = vst [vmem:[%s293 + $0x50] sm:$0xff] %v1023
        %1159 = vst [vmem:[%s293 + $0x58] sm:$0xff] %v1121
        %1160 = vst [vmem:[%s293 + $0x60] sm:$0xff] %v1026
        %1161 = vst [vmem:[%s293 + $0x68] sm:$0xff] %v1124
        %1162 = vst [vmem:[%s293 + $0x70] sm:$0xff] %v1028
        %1163 = vst [vmem:[%s293 + $0x78] sm:$0xff] %v1126
        %1164 = vst [vmem:[%s293 + $0x80] sm:$0xff] %v1031
        %1165 = vst [vmem:[%s293 + $0x88] sm:$0xff] %v1129
        %1166 = vst [vmem:[%s293 + $0x90] sm:$0xff] %v1033
        %1167 = vst [vmem:[%s293 + $0x98] sm:$0xff] %v1131
        %1168 = vst [vmem:[%s293 + $0xa0] sm:$0xff] %v1036
        %1169 = vst [vmem:[%s293 + $0xa8] sm:$0xff] %v1134
        %1170 = vst [vmem:[%s293 + $0xb0] sm:$0xff] %v1038
        %1171 = vst [vmem:[%s293 + $0xb8] sm:$0xff] %v1136
        %1172 = vst [vmem:[%s293 + $0xc0] sm:$0xff] %v1041
        %1173 = vst [vmem:[%s293 + $0xc8] sm:$0xff] %v1139
        %1174 = vst [vmem:[%s293 + $0xd0] sm:$0xff] %v1043
        %1175 = vst [vmem:[%s293 + $0xd8] sm:$0xff] %v1141
        %1176 = vst [vmem:[%s293 + $0xe0] sm:$0xff] %v1046
        %1177 = vst [vmem:[%s293 + $0xe8] sm:$0xff] %v1144
        %1178 = vst [vmem:[%s293 + $0xf0] sm:$0xff] %v1048
        %1179 = vst [vmem:[%s293 + $0xf8] sm:$0xff] %v1146
        %s1180 = sand.u32 %s142, 1
        %s1181 = scalar_lea.sflag [#allocation4], %s1180
        %s1182 = sand.u32 %s142, 1
        %s1183 = smul.addr %s1182, 256
        %s1184 = scalar_lea.vmem [#allocation10], %s1183
        // Predicated region
        $region57: #{tpu_custom_call.1} parent=39 // pred_check
          %p1185 = pneg %p152
        $region58: #{tpu_custom_call.1} parent=39 // pred_check_branch
          %1187 = sbr.rel (%p1185) target = $region60
        $region59: #{tpu_custom_call.1} parent=39 // pred_region
          %s1188 = smul.u32 16, %s24
          %1190 = vsyncadd %s1181, 0
          %s1191 = smul.addr %s1188, 2
          %s1192 = smul.addr %s1191, 8
          %s1193 = scalar_lea.hbm %s5, %s1192
          %s1194 = sshll.u32 %s1184, 4
          %s1195 = int_to_ptr.vmem [resolvable:$true] %s1194
          %s1196 = sshll.u32 %s1193, 4
          %s1197 = int_to_ptr.hbm [resolvable:$true] %s1196
          %1202 = dma.vmem_to_hbm [thread:$0]  %s1195, 4096, %s1197, %s1181, 256, 256, 16
        $region60: #{tpu_custom_call.1} parent=39 // pred_fallthru
          _
      $region40: #{tpu_custom_call.1} parent=5 // pred_fallthru
        _
      %p1203 = scmp.le.s32.totalorder 2, %s19
      // Predicated region
      $region61: #{tpu_custom_call.1} parent=5 // pred_check
        %p1204 = pneg %p1203
      $region62: #{tpu_custom_call.1} parent=5 // pred_check_branch
        %1206 = sbr.rel (%p1204) target = $region64
      $region63: #{tpu_custom_call.1} parent=5 // pred_region
        %s1207 = ssub.s32 %s19, 2
        // Predicated region
        $region65: #{tpu_custom_call.1} parent=63 // pred_check
          %p1208 = pneg %p158
        $region66: #{tpu_custom_call.1} parent=63 // pred_check_branch
          %1210 = sbr.rel (%p1208) target = $region68
        $region67: #{tpu_custom_call.1} parent=63 // pred_region
          %s1211 = sand.u32 %s143, 1
          %s1212 = scalar_lea.sflag [#allocation4], %s1211
          %s1213 = sand.u32 %s143, 1
          %s1214 = smul.addr %s1213, 256
          %s1215 = scalar_lea.vmem [#allocation10], %s1214
          %1217 = dma.done %s1212, 4096
        $region68: #{tpu_custom_call.1} parent=63 // pred_fallthru
          _
      $region64: #{tpu_custom_call.1} parent=5 // pred_fallthru
        _
    $region6: #{tpu_custom_call.1} parent=1 // loop_footer
      %s23 = sadd.s32 1, %s19
    $region7: #{tpu_custom_call.1} parent=1 // loop_footer_branch
      %18 = sbr.rel target = $region3
    $region8: #{tpu_custom_call.1} parent=1 // loop_exit
      _
    %1218 = vsyncpa [#allocation3], 1
    %s1219 = scalar_lea.sflag [#allocation3], 1
    %1220 = vsyncpa %s1219, 1
    %1221 = vsyncpa [#allocation6], 1
    %1222 = vsyncpa [#allocation9], 1
    %1223 = vsyncpa [#allocation4], 1
    %s1224 = scalar_lea.sflag [#allocation4], 1
    %1225 = vsyncpa %s1224, 1

</llo_original>
